<compile_context>
chip_gen: v6e
topology: v6e:2x2x1
jax: 0.10.0
libtpu: 0.0.40
codegen_flags: <defaults>
</compile_context>

<pallas_src>
import jax
import jax.numpy as jnp
from jax.experimental import pallas as pl
from jax.experimental.pallas import tpu as pltpu


LANE = 128
MAX_W = 2048                      # lane width cap (512–2048 amortizes per-step cost)
BLOCK_BYTES = 4 * 1024 * 1024     # ~4 MiB blocks: 4 bufs x 4 MiB = 16 MiB in flight
VMEM_LIMIT = 48 * 1024 * 1024     # safe on v7x (64 MiB VMEM) and v5e/v6e


def _copy_kernel(x_ref, o_ref):
    # Straight vld/vst block copy at full lane width — no reshape, no relayout.
    o_ref[...] = x_ref[...]


def _largest_aligned_divisor(dim: int, align: int, cap: int):
    """Largest t with t % align == 0, dim % t == 0, t <= cap; None if impossible."""
    if dim % align != 0:
        return None
    cap = min(cap, dim)
    best = None
    t = align
    while t <= cap:
        if dim % t == 0:
            best = t
        t += align
    return best


def _choose_flat_tiling(N: int, itemsize: int, sublane: int):
    """Pick (W, R, tr, tw): retile the flat N-element stream as (R, W) and copy
    it in lane-dense (tr, tw) blocks.  Returns None if no aligned tiling exists."""
    if N % LANE != 0:
        return None
    fallback = None
    max_k = min(MAX_W, N) // LANE
    for k in range(max_k, 0, -1):
        w = k * LANE
        if N % w != 0:
            continue
        r = N // w
        row_budget = max(1, BLOCK_BYTES // (w * itemsize))
        tr = _largest_aligned_divisor(r, sublane, row_budget)
        if tr is not None:
            return (w, r, tr, w)            # fully (8,128)-aligned tiling
        if fallback is None:
            # Rows not sublane-divisible: full-extent rows (legal), tile columns.
            col_budget = max(LANE, BLOCK_BYTES // max(1, r * itemsize))
            tw = _largest_aligned_divisor(w, LANE, col_budget)
            if tw is not None and r * tw * itemsize <= BLOCK_BYTES:
                fallback = (w, r, r, tw)
    return fallback


def flatten_layer(x: jax.Array, run_kernel: bool = True) -> jax.Array:
    """Pallas equivalent of FlattenLayer.forward: x.view(x.shape[0], -1)."""
    B = x.shape[0]
    F = 1
    for d in x.shape[1:]:
        F *= d

    # Metadata-only flatten (row-major, contiguous).
    x2 = x.reshape(B, F)
    if not run_kernel:
        # Standalone flatten: reshape is free; the copy can never beat "do nothing".
        return x2

    N = B * F
    itemsize = jnp.dtype(x.dtype).itemsize
    sublane = 8 * max(1, 4 // itemsize)     # 8 (f32), 16 (bf16), 32 (int8)

    tiling = _choose_flat_tiling(N, itemsize, sublane)
    if tiling is None:
        # No lane-aligned retiling of the flat stream — the flatten is a pure
        # metadata reshape anyway, so return it rather than emit masked blocks.
        return x2

    W, R, tr, tw = tiling
    x_flat = x2.reshape(R, W)               # still metadata-only (row-major)
    grid = (R // tr, W // tw)

    out_flat = pl.pallas_call(
        _copy_kernel,
        out_shape=jax.ShapeDtypeStruct((R, W), x.dtype),
        grid=grid,
        in_specs=[pl.BlockSpec((tr, tw), lambda i, j: (i, j))],
        out_specs=pl.BlockSpec((tr, tw), lambda i, j: (i, j)),
        compiler_params=pltpu.CompilerParams(
            dimension_semantics=("parallel", "parallel"),
            vmem_limit_bytes=VMEM_LIMIT,
        ),
    )(x_flat)

    return out_flat.reshape(B, F)


if __name__ == "__main__":
    key = jax.random.PRNGKey(0)
    # Small NCHW input consistent with a conv-net flatten: (batch=2, C=4, H=16, W=16)
    x = jax.random.normal(key, (2, 4, 16, 16), dtype=jnp.float32)

    out = flatten_layer(x)
    jax.block_until_ready(out)

    # Verify against reference flatten semantics (torch .view(B, -1) == row-major reshape)
    ref = x.reshape(x.shape[0], -1)
    assert out.shape == (2, 4 * 16 * 16), out.shape
    assert jnp.array_equal(out, ref), "flatten mismatch"

    print("KERNEL_OK")
</pallas_src>

<mosaic_0001>
module attributes {stable_mosaic.version = 11 : i64} {
  func.func @_copy_kernel(%arg0: i32, %arg1: i32, %arg2: memref<8x256xf32, #tpu.memory_space<vmem>>, %arg3: memref<8x256xf32, #tpu.memory_space<vmem>>) attributes {dimension_semantics = [#tpu.dimension_semantics<parallel>, #tpu.dimension_semantics<parallel>], iteration_bounds = array<i64: 1, 1>, scalar_prefetch = 0 : i64, scratch_operands = 0 : i64, tpu.core_type = #tpu.core_type<tc>, window_params = [{transform_indices = @transform_0, window_bounds = array<i64: 8, 256>}, {transform_indices = @transform_1, window_bounds = array<i64: 8, 256>}]} {
    %c0 = arith.constant 0 : index
    %c0_0 = arith.constant 0 : index
    %0 = vector.load %arg2[%c0, %c0_0] : memref<8x256xf32, #tpu.memory_space<vmem>>, vector<8x256xf32>
    %c0_1 = arith.constant 0 : index
    %c0_2 = arith.constant 0 : index
    %1 = vector.load %arg3[%c0_1, %c0_2] : memref<8x256xf32, #tpu.memory_space<vmem>>, vector<8x256xf32>
    tpu.vector_store %arg3[%c0_1, %c0_2], %0 {strides = array<i32>} : memref<8x256xf32, #tpu.memory_space<vmem>>, vector<8x256xf32>,
    return
  }
  func.func @transform_0(%arg0: i32, %arg1: i32) -> (i32, i32) {
    %c0_i32 = arith.constant 0 : i32
    return %arg0, %arg1 : i32, i32
  }
  func.func @transform_1(%arg0: i32, %arg1: i32) -> (i32, i32) {
    %c0_i32 = arith.constant 0 : i32
    return %arg0, %arg1 : i32, i32
  }
}

</mosaic_0001>

<llo_original>
// kernel: tpu_custom_call.1
$region0: #{tpu_custom_call.1}
  #allocation0 [shape = 'u32[]', space=smem, size = 0x4, offset = 0x4, fixed_abs, tag = 'smem constant byte address 0x4 - core index']
  #allocation1 [shape = 'u32[144,128]{1,0:T(1,128)}', space=vmem, size = 0x12000, scoped, tag = 'internal scratch']
  %s0 = inlined_call_operand.hbm [shape: f32[8,256], index: 0, kind: input, shape index: {}]
  %s1 = inlined_call_operand.hbm [shape: f32[8,256], index: 1, kind: output, shape index: {}]
  %s2 = sld [smem:[#allocation0]]
  $region18: #{tpu_custom_call.1} parent=0
    _
  %s4 = ssub.s32 1, %s2
  %s5 = scalar_select 0, %s4, %s2
  $region1: #{tpu_custom_call.1} parent=0
    #allocation2 [shape = 'u8[8192]{0}', space=vmem, size = 0x2000, scoped, tag = 'input window, operand 0, single buffered']
    #allocation3 [shape = 's32[1]{0}', space=sflag, size = 0x4, scoped, tag = 'scoped memory for tpu_custom_call.1']
    #allocation4 [shape = 's32[1]{0}', space=sflag, size = 0x4, scoped, tag = 'scoped memory for tpu_custom_call.1']
    #allocation5 [shape = 'u8[8192]{0}', space=vmem, size = 0x2000, scoped, tag = 'output window, operand 0, single buffered']
    %6 = vsyncpa [#allocation3], 0
    %7 = vsyncpa [#allocation4], 0
    // Predicated region
    $region2: #{tpu_custom_call.1} parent=1 // pred_check
      _
    $region3: #{tpu_custom_call.1} parent=1 // pred_check_branch
      %9 = sbr.rel (0) target = $region5
    $region4: #{tpu_custom_call.1} parent=1 // pred_region
      %s11 = ssub.s32 256, 256
      %12 = vsyncadd [#allocation3], %s11
      %s14 = sshll.u32 [#allocation2], 4
      %s15 = int_to_ptr.vmem [resolvable:$true] %s14
      %17 = dma.hbm_to_vmem [thread:$0]  %s0, 256, %s15, [#allocation3]
    $region5: #{tpu_custom_call.1} parent=1 // pred_fallthru
      _
    // Predicated region
    $region6: #{tpu_custom_call.1} parent=1 // pred_check
      _
    $region7: #{tpu_custom_call.1} parent=1 // pred_check_branch
      %19 = sbr.rel (0) target = $region9
    $region8: #{tpu_custom_call.1} parent=1 // pred_region
      %20 = dma.done [#allocation3], 256
    $region9: #{tpu_custom_call.1} parent=1 // pred_fallthru
      _
    %v21 = vld [vmem:[#allocation2] sm:$0xff]
    %v22 = vld [vmem:[#allocation2 + $0x8] sm:$0xff]
    %23 = vst [vmem:[#allocation5] sm:$0xff] %v21
    %24 = vst [vmem:[#allocation5 + $0x8] sm:$0xff] %v22
    // Predicated region
    $region10: #{tpu_custom_call.1} parent=1 // pred_check
      _
    $region11: #{tpu_custom_call.1} parent=1 // pred_check_branch
      %26 = sbr.rel (0) target = $region13
    $region12: #{tpu_custom_call.1} parent=1 // pred_region
      %s28 = ssub.s32 256, 256
      %29 = vsyncadd [#allocation4], %s28
      %s31 = sshll.u32 [#allocation5], 4
      %s32 = int_to_ptr.vmem [resolvable:$true] %s31
      %34 = dma.vmem_to_hbm [thread:$0]  %s32, 256, %s1, [#allocation4]
    $region13: #{tpu_custom_call.1} parent=1 // pred_fallthru
      _
    // Predicated region
    $region14: #{tpu_custom_call.1} parent=1 // pred_check
      _
    $region15: #{tpu_custom_call.1} parent=1 // pred_check_branch
      %36 = sbr.rel (0) target = $region17
    $region16: #{tpu_custom_call.1} parent=1 // pred_region
      %37 = dma.done [#allocation4], 256
    $region17: #{tpu_custom_call.1} parent=1 // pred_fallthru
      _
    %38 = vsyncpa [#allocation3], 1
    %39 = vsyncpa [#allocation4], 1

</llo_original>
